<compile_context>
chip_gen: v7x
topology: tpu7x:2x2x1
jax: 0.10.0
libtpu: 0.0.40
codegen_flags: <defaults>
</compile_context>

<pallas_src>
import jax
import jax.numpy as jnp
from jax.experimental import pallas as pl
from jax.experimental.pallas import tpu as pltpu


def weaver_kernel(x_ref, w1_ref, b1_ref, w2_ref, b2_ref, o_ref):
    # x_ref:  (tm, K1) f32      (K1 = pack*C_in, lane-dense 128 when pack > 1)
    # w1_ref: (K1, K2) bf16     b1_ref: (1, K2) f32   (K2 = pack*C_out)
    # w2_ref: (K2, K1) bf16     b2_ref: (1, K1) f32
    # o_ref:  (tm, K1) f32
    x = x_ref[...].astype(jnp.bfloat16)                       # bf16 MXU operand
    h = jnp.dot(x, w1_ref[...], preferred_element_type=jnp.float32) + b1_ref[...]
    hb = h.astype(jnp.bfloat16)
    hb = hb * jax.nn.sigmoid(hb)                               # SiLU in bf16 (EUP)
    # TODO(synk): dropout(p=0.1, train=True) not implemented; eval-mode forward
    # (training=False) makes dropout the identity, which is what we reproduce.
    out = jnp.dot(hb, w2_ref[...], preferred_element_type=jnp.float32) + b2_ref[...]
    o_ref[...] = out.astype(o_ref.dtype)


def _block_diag(w, pack):
    """(in, out) -> (pack*in, pack*out) block-diagonal with `pack` copies of w."""
    if pack == 1:
        return w
    return jnp.kron(jnp.eye(pack, dtype=w.dtype), w)


def _pack_factor(c_in):
    """Rows packed per 128-lane row (lane-dense layout)."""
    if c_in < 128 and 128 % c_in == 0:
        return 128 // c_in
    return 1


def pack_weaver_params(w1, b1, w2, b2):
    """Precompute the block-diagonal bf16 weights once (hoisted off the per-call path)."""
    c_in, c_out = w1.shape
    pack = _pack_factor(c_in)
    w1p = _block_diag(w1, pack).astype(jnp.bfloat16)           # (K1, K2) resident
    w2p = _block_diag(w2, pack).astype(jnp.bfloat16)           # (K2, K1) resident
    b1p = jnp.tile(b1, pack).reshape(1, pack * c_out).astype(jnp.float32)
    b2p = jnp.tile(b2, pack).reshape(1, pack * c_in).astype(jnp.float32)
    return (w1p, b1p, w2p, b2p), pack


def feature_weaver(x, packed_params, pack, *, tm=4096, training=False):
    """x: [B, S, C_in] -> [B, S, C_in]. Matches FeatureWeaver.forward (eval mode)."""
    if training:
        # TODO(synk): train-mode dropout (p=0.1) with RNG masking not implemented.
        raise NotImplementedError("train-mode dropout (p=0.1) is not implemented")

    w1p, b1p, w2p, b2p = packed_params
    B, S, C_in = x.shape
    M = B * S
    K1 = pack * C_in
    K2 = w1p.shape[1]

    # Pad rows up to a multiple of `pack` so every shape stays on the
    # lane-dense 128-wide path (padding is sliced off after the kernel).
    M_pad = pl.cdiv(M, pack) * pack
    x2d_full = x.reshape(M, C_in)
    if M_pad != M:
        x2d_full = jnp.pad(x2d_full, ((0, M_pad - M), (0, 0)))
    Mp = M_pad // pack
    x2d = x2d_full.reshape(Mp, K1)                              # pure layout reshape

    # Row tile: big enough to amortize the ~0.35 us per-step pipeline overhead;
    # clamp to Mp (full-dim escape hatch of the (8,128) rule for tiny shapes).
    tm = min(tm, Mp)
    if tm < Mp:
        tm = max(8, (tm // 8) * 8)
    # Keep at least two grid steps for mid/large inputs so both v7x TensorCores
    # get work (grid axis is "parallel").
    if Mp >= 16:
        half = ((pl.cdiv(Mp, 2) + 7) // 8) * 8
        tm = min(tm, half)

    grid = (pl.cdiv(Mp, tm),)
    out2d = pl.pallas_call(
        weaver_kernel,
        out_shape=jax.ShapeDtypeStruct((Mp, K1), x.dtype),
        grid_spec=pltpu.PrefetchScalarGridSpec(
            num_scalar_prefetch=0,
            grid=grid,
            in_specs=[
                pl.BlockSpec((tm, K1), lambda i: (i, 0)),       # x row tile
                pl.BlockSpec((K1, K2), lambda i: (0, 0)),       # W1 (resident, bf16)
                pl.BlockSpec((1, K2), lambda i: (0, 0)),        # b1 (f32)
                pl.BlockSpec((K2, K1), lambda i: (0, 0)),       # W2 (resident, bf16)
                pl.BlockSpec((1, K1), lambda i: (0, 0)),        # b2 (f32)
            ],
            out_specs=pl.BlockSpec((tm, K1), lambda i: (i, 0)),
        ),
        compiler_params=pltpu.CompilerParams(
            dimension_semantics=("parallel",),
            vmem_limit_bytes=40 << 20,
        ),
    )(x2d, w1p, b1p, w2p, b2p)

    out = out2d.reshape(M_pad, C_in)
    if M_pad != M:
        out = out[:M]
    return out.reshape(B, S, C_in)


def _reference(x, w1, b1, w2, b2):
    h = jnp.einsum("bsc,co->bso", x, w1) + b1
    h = h * jax.nn.sigmoid(h)
    return jnp.einsum("bso,oc->bsc", h, w2) + b2


if __name__ == "__main__":
    # configs.input_channel = 32, configs.output_channel = 64
    C_in, C_out = 32, 64

    key = jax.random.PRNGKey(0)
    kx, k1, k2, k3, k4, kx2 = jax.random.split(key, 6)

    # Deterministic parameter init (PyTorch Linear-style uniform bounds),
    # stored pre-transposed as [in, out].
    bound1 = 1.0 / jnp.sqrt(C_in)
    w1 = jax.random.uniform(k1, (C_in, C_out), jnp.float32, -bound1, bound1)
    b1 = jax.random.uniform(k2, (C_out,), jnp.float32, -bound1, bound1)
    bound2 = 1.0 / jnp.sqrt(C_out)
    w2 = jax.random.uniform(k3, (C_out, C_in), jnp.float32, -bound2, bound2)
    b2 = jax.random.uniform(k4, (C_in,), jnp.float32, -bound2, bound2)

    packed_params, pack = pack_weaver_params(w1, b1, w2, b2)   # done once

    # Main shape: B*S divisible by pack (lane-dense path, no padding).
    B, S = 2, 8
    x = jax.random.normal(kx, (B, S, C_in), dtype=jnp.float32)
    out = jax.block_until_ready(feature_weaver(x, packed_params, pack))
    ref = _reference(x, w1, b1, w2, b2)
    assert out.shape == (B, S, C_in)
    err = float(jnp.max(jnp.abs(out - ref)))
    assert err < 5e-2, f"max abs err {err}"  # bf16 matmul/SiLU -> relaxed tol

    # Padded-rows shape: B*S not divisible by pack exercises the zero-pad path.
    B2, S2 = 3, 5
    x2 = jax.random.normal(kx2, (B2, S2, C_in), dtype=jnp.float32)
    out2 = jax.block_until_ready(feature_weaver(x2, packed_params, pack))
    ref2 = _reference(x2, w1, b1, w2, b2)
    assert out2.shape == (B2, S2, C_in)
    err2 = float(jnp.max(jnp.abs(out2 - ref2)))
    assert err2 < 5e-2, f"max abs err {err2}"

    print("KERNEL_OK")
</pallas_src>

<mosaic_0001>
module attributes {stable_mosaic.version = 11 : i64} {
  func.func @weaver_kernel(%arg0: i32, %arg1: memref<4x128xf32, #tpu.memory_space<vmem>>, %arg2: memref<128x256xbf16, #tpu.memory_space<vmem>>, %arg3: memref<1x256xf32, #tpu.memory_space<vmem>>, %arg4: memref<256x128xbf16, #tpu.memory_space<vmem>>, %arg5: memref<1x128xf32, #tpu.memory_space<vmem>>, %arg6: memref<4x128xf32, #tpu.memory_space<vmem>>) attributes {dimension_semantics = [#tpu.dimension_semantics<parallel>], iteration_bounds = array<i64: 1>, scalar_prefetch = 0 : i64, scratch_operands = 0 : i64, tpu.core_type = #tpu.core_type<tc>, window_params = [{transform_indices = @transform_0, window_bounds = array<i64: 4, 128>}, {pipeline_mode = #tpu.pipeline_mode<synchronous>, transform_indices = @transform_1, window_bounds = array<i64: 128, 256>}, {pipeline_mode = #tpu.pipeline_mode<synchronous>, transform_indices = @transform_2, window_bounds = array<i64: 1, 256>}, {pipeline_mode = #tpu.pipeline_mode<synchronous>, transform_indices = @transform_3, window_bounds = array<i64: 256, 128>}, {pipeline_mode = #tpu.pipeline_mode<synchronous>, transform_indices = @transform_4, window_bounds = array<i64: 1, 128>}, {transform_indices = @transform_5, window_bounds = array<i64: 4, 128>}]} {
    %c0 = arith.constant 0 : index
    %c0_0 = arith.constant 0 : index
    %0 = vector.load %arg1[%c0, %c0_0] : memref<4x128xf32, #tpu.memory_space<vmem>>, vector<4x128xf32>
    %1 = arith.truncf %0 : vector<4x128xf32> to vector<4x128xbf16>
    %c0_1 = arith.constant 0 : index
    %c0_2 = arith.constant 0 : index
    %2 = vector.load %arg2[%c0_1, %c0_2] : memref<128x256xbf16, #tpu.memory_space<vmem>>, vector<128x256xbf16>
    %cst = arith.constant dense<0.000000e+00> : vector<4x256xf32>
    %3 = tpu.matmul %1, %2, %cst {dimension_numbers = #tpu.dot_dimension_numbers<[1], [0], [0], [1], [0, 0, 1, 1], [], []>} : vector<4x128xbf16>, vector<128x256xbf16>, vector<4x256xf32> -> vector<4x256xf32>
    %c0_3 = arith.constant 0 : index
    %c0_4 = arith.constant 0 : index
    %4 = vector.load %arg3[%c0_3, %c0_4] : memref<1x256xf32, #tpu.memory_space<vmem>>, vector<1x256xf32>
    %5 = vector.broadcast %4 : vector<1x256xf32> to vector<4x256xf32>
    %6 = arith.addf %3, %5 : vector<4x256xf32>
    %7 = arith.truncf %6 : vector<4x256xf32> to vector<4x256xbf16>
    %8 = arith.negf %7 : vector<4x256xbf16>
    %9 = math.exp %8 : vector<4x256xbf16>
    %cst_5 = arith.constant 1.000000e+00 : bf16
    %10 = vector.broadcast %cst_5 : bf16 to vector<4x256xbf16>
    %11 = arith.addf %10, %9 : vector<4x256xbf16>
    %12 = arith.divf %10, %11 : vector<4x256xbf16>
    %13 = arith.mulf %7, %12 : vector<4x256xbf16>
    %c0_6 = arith.constant 0 : index
    %c0_7 = arith.constant 0 : index
    %14 = vector.load %arg4[%c0_6, %c0_7] : memref<256x128xbf16, #tpu.memory_space<vmem>>, vector<256x128xbf16>
    %cst_8 = arith.constant dense<0.000000e+00> : vector<4x128xf32>
    %15 = tpu.matmul %13, %14, %cst_8 {dimension_numbers = #tpu.dot_dimension_numbers<[1], [0], [0], [1], [0, 0, 1, 1], [], []>} : vector<4x256xbf16>, vector<256x128xbf16>, vector<4x128xf32> -> vector<4x128xf32>
    %c0_9 = arith.constant 0 : index
    %c0_10 = arith.constant 0 : index
    %16 = vector.load %arg5[%c0_9, %c0_10] : memref<1x128xf32, #tpu.memory_space<vmem>>, vector<1x128xf32>
    %17 = vector.broadcast %16 : vector<1x128xf32> to vector<4x128xf32>
    %18 = arith.addf %15, %17 : vector<4x128xf32>
    %c0_11 = arith.constant 0 : index
    %c0_12 = arith.constant 0 : index
    %19 = vector.load %arg6[%c0_11, %c0_12] : memref<4x128xf32, #tpu.memory_space<vmem>>, vector<4x128xf32>
    tpu.vector_store %arg6[%c0_11, %c0_12], %18 {strides = array<i32>} : memref<4x128xf32, #tpu.memory_space<vmem>>, vector<4x128xf32>,
    return
  }
  func.func @transform_0(%arg0: i32) -> (i32, i32) {
    %c0_i32 = arith.constant 0 : i32
    %c0_i32_0 = arith.constant 0 : i32
    return %arg0, %c0_i32 : i32, i32
  }
  func.func @transform_1(%arg0: i32) -> (i32, i32) {
    %c0_i32 = arith.constant 0 : i32
    %c0_i32_0 = arith.constant 0 : i32
    %c0_i32_1 = arith.constant 0 : i32
    return %c0_i32, %c0_i32_0 : i32, i32
  }
  func.func @transform_2(%arg0: i32) -> (i32, i32) {
    %c0_i32 = arith.constant 0 : i32
    %c0_i32_0 = arith.constant 0 : i32
    %c0_i32_1 = arith.constant 0 : i32
    return %c0_i32, %c0_i32_0 : i32, i32
  }
  func.func @transform_3(%arg0: i32) -> (i32, i32) {
    %c0_i32 = arith.constant 0 : i32
    %c0_i32_0 = arith.constant 0 : i32
    %c0_i32_1 = arith.constant 0 : i32
    return %c0_i32, %c0_i32_0 : i32, i32
  }
  func.func @transform_4(%arg0: i32) -> (i32, i32) {
    %c0_i32 = arith.constant 0 : i32
    %c0_i32_0 = arith.constant 0 : i32
    %c0_i32_1 = arith.constant 0 : i32
    return %c0_i32, %c0_i32_0 : i32, i32
  }
  func.func @transform_5(%arg0: i32) -> (i32, i32) {
    %c0_i32 = arith.constant 0 : i32
    %c0_i32_0 = arith.constant 0 : i32
    return %arg0, %c0_i32 : i32, i32
  }
}

</mosaic_0001>

<llo_original>
// kernel: tpu_custom_call.1
$region0: #{tpu_custom_call.1}
  #allocation0 [shape = 'u32[]', space=smem, size = 0x4, offset = 0x4, fixed_abs, tag = 'smem constant byte address 0x4 - core index']
  #allocation1 [shape = 'u32[144,128]{1,0:T(1,128)}', space=vmem, size = 0x12000, scoped, tag = 'internal scratch']
  %s0 = inlined_call_operand.hbm [shape: f32[4,128], index: 0, kind: input, shape index: {}]
  %s1 = inlined_call_operand.hbm [shape: bf16[128,256], index: 1, kind: input, shape index: {}]
  %s2 = inlined_call_operand.vmem [shape: f32[1,256], index: 2, kind: input, shape index: {}]
  %s3 = inlined_call_operand.hbm [shape: bf16[256,128], index: 3, kind: input, shape index: {}]
  %s4 = inlined_call_operand.vmem [shape: f32[1,128], index: 4, kind: input, shape index: {}]
  %s5 = inlined_call_operand.hbm [shape: f32[4,128], index: 5, kind: output, shape index: {}]
  %s6 = sld [smem:[#allocation0]]
  $region42: #{tpu_custom_call.1} parent=0
    _
  %s8 = ssub.s32 1, %s6
  %s9 = scalar_select 0, %s8, %s6
  $region1: #{tpu_custom_call.1} parent=0
    #allocation2 [shape = 'u8[2048]{0}', space=vmem, size = 0x800, scoped, tag = 'input window, operand 0, single buffered']
    #allocation3 [shape = 's32[1]{0}', space=sflag, size = 0x4, scoped, tag = 'scoped memory for tpu_custom_call.1']
    #allocation4 [shape = 's32[1]{0}', space=sflag, size = 0x4, scoped, tag = 'scoped memory for tpu_custom_call.1']
    #allocation5 [shape = 'u8[65536]{0}', space=vmem, size = 0x10000, scoped, tag = 'input window, operand 1, single buffered']
    #allocation6 [shape = 's32[1]{0}', space=sflag, size = 0x4, scoped, tag = 'scoped memory for tpu_custom_call.1']
    #allocation7 [shape = 'u8[65536]{0}', space=vmem, size = 0x10000, scoped, tag = 'input window, operand 3, single buffered']
    #allocation8 [shape = 'u8[2048]{0}', space=vmem, size = 0x800, scoped, tag = 'output window, operand 0, single buffered']
    %10 = vsyncpa [#allocation3], 0
    %11 = vsyncpa [#allocation6], 0
    %12 = vsyncpa [#allocation4], 0
    // Predicated region
    $region2: #{tpu_custom_call.1} parent=1 // pred_check
      _
    $region3: #{tpu_custom_call.1} parent=1 // pred_check_branch
      %14 = sbr.rel (0) target = $region5
    $region4: #{tpu_custom_call.1} parent=1 // pred_region
      %s16 = ssub.s32 64, 64
      %17 = vsyncadd [#allocation3], %s16
      %s19 = sshll.u32 [#allocation2], 4
      %s20 = int_to_ptr.vmem [resolvable:$true] %s19
      %22 = dma.hbm_to_vmem [thread:$0]  %s0, 64, %s20, [#allocation3]
    $region5: #{tpu_custom_call.1} parent=1 // pred_fallthru
      _
    // Predicated region
    $region6: #{tpu_custom_call.1} parent=1 // pred_check
      _
    $region7: #{tpu_custom_call.1} parent=1 // pred_check_branch
      %24 = sbr.rel (0) target = $region9
    $region8: #{tpu_custom_call.1} parent=1 // pred_region
      %s26 = ssub.s32 2048, 2048
      %27 = vsyncadd [#allocation6], %s26
      %s28 = sshll.u32 [#allocation5], 4
      %s29 = int_to_ptr.vmem [resolvable:$true] %s28
      %34 = dma.hbm_to_vmem [thread:$0]  %s1, 2048, %s29, [#allocation6], 128, 128, 8
    $region9: #{tpu_custom_call.1} parent=1 // pred_fallthru
      _
    // Predicated region
    $region10: #{tpu_custom_call.1} parent=1 // pred_check
      _
    $region11: #{tpu_custom_call.1} parent=1 // pred_check_branch
      %36 = sbr.rel (0) target = $region13
    $region12: #{tpu_custom_call.1} parent=1 // pred_region
      _
    $region13: #{tpu_custom_call.1} parent=1 // pred_fallthru
      _
    // Predicated region
    $region14: #{tpu_custom_call.1} parent=1 // pred_check
      _
    $region15: #{tpu_custom_call.1} parent=1 // pred_check_branch
      %38 = sbr.rel (0) target = $region17
    $region16: #{tpu_custom_call.1} parent=1 // pred_region
      %s40 = ssub.s32 2048, 2048
      %41 = vsyncadd [#allocation6], %s40
      %s42 = sshll.u32 [#allocation7], 4
      %s43 = int_to_ptr.vmem [resolvable:$true] %s42
      %48 = dma.hbm_to_vmem [thread:$0]  %s3, 2048, %s43, [#allocation6], 64, 64, 4
    $region17: #{tpu_custom_call.1} parent=1 // pred_fallthru
      _
    // Predicated region
    $region18: #{tpu_custom_call.1} parent=1 // pred_check
      _
    $region19: #{tpu_custom_call.1} parent=1 // pred_check_branch
      %50 = sbr.rel (0) target = $region21
    $region20: #{tpu_custom_call.1} parent=1 // pred_region
      _
    $region21: #{tpu_custom_call.1} parent=1 // pred_fallthru
      _
    // Predicated region
    $region22: #{tpu_custom_call.1} parent=1 // pred_check
      _
    $region23: #{tpu_custom_call.1} parent=1 // pred_check_branch
      %52 = sbr.rel (0) target = $region25
    $region24: #{tpu_custom_call.1} parent=1 // pred_region
      %53 = dma.done [#allocation3], 64
    $region25: #{tpu_custom_call.1} parent=1 // pred_fallthru
      _
    // Predicated region
    $region26: #{tpu_custom_call.1} parent=1 // pred_check
      _
    $region27: #{tpu_custom_call.1} parent=1 // pred_check_branch
      %55 = sbr.rel (0) target = $region29
    $region28: #{tpu_custom_call.1} parent=1 // pred_region
      %56 = dma.done [#allocation6], 2048
    $region29: #{tpu_custom_call.1} parent=1 // pred_fallthru
      _
    // Predicated region
    $region30: #{tpu_custom_call.1} parent=1 // pred_check
      _
    $region31: #{tpu_custom_call.1} parent=1 // pred_check_branch
      %58 = sbr.rel (0) target = $region33
    $region32: #{tpu_custom_call.1} parent=1 // pred_region
      %59 = dma.done [#allocation6], 2048
    $region33: #{tpu_custom_call.1} parent=1 // pred_fallthru
      _
    %v62 = vld [vmem:[#allocation2] sm:$0xf]
    %v63 = vpack.c.bf16 %v62, %v62
    %v64 = vld [vmem:[#allocation5] sm:$0xff]
    %v65 = vld [vmem:[#allocation5 + $0x8] sm:$0xff]
    %v66 = vld [vmem:[#allocation5 + $0x10] sm:$0xff]
    %v67 = vld [vmem:[#allocation5 + $0x18] sm:$0xff]
    %v68 = vld [vmem:[#allocation5 + $0x20] sm:$0xff]
    %v69 = vld [vmem:[#allocation5 + $0x28] sm:$0xff]
    %v70 = vld [vmem:[#allocation5 + $0x30] sm:$0xff]
    %v71 = vld [vmem:[#allocation5 + $0x38] sm:$0xff]
    %v72 = vld [vmem:[#allocation5 + $0x40] sm:$0xff]
    %v73 = vld [vmem:[#allocation5 + $0x48] sm:$0xff]
    %v74 = vld [vmem:[#allocation5 + $0x50] sm:$0xff]
    %v75 = vld [vmem:[#allocation5 + $0x58] sm:$0xff]
    %v76 = vld [vmem:[#allocation5 + $0x60] sm:$0xff]
    %v77 = vld [vmem:[#allocation5 + $0x68] sm:$0xff]
    %v78 = vld [vmem:[#allocation5 + $0x70] sm:$0xff]
    %v79 = vld [vmem:[#allocation5 + $0x78] sm:$0xff]
    %v80 = vld [vmem:[%s2] sm:$0x3]
    %v82 = vlaneseq
    %v83 = vshrl.u32 %v82, 7
    %v84 = vsub.s32 0, %v83
    %v85 = vrot.slane %v80, %v84
    %v86 = vlaneseq
    %v87 = vshrl.u32 %v86, 7
    %v88 = vsub.s32 1, %v87
    %v89 = vrot.slane %v80, %v88
    %v108 = vunpack.c.l.b16 %v64
    %v109 = vunpack.c.h.b16 %v64
    %v110 = vunpack.c.l.b16 %v65
    %v111 = vunpack.c.h.b16 %v65
    %v112 = vunpack.c.l.b16 %v66
    %v113 = vunpack.c.h.b16 %v66
    %v114 = vunpack.c.l.b16 %v67
    %v115 = vunpack.c.h.b16 %v67
    %v116 = vunpack.c.l.b16 %v68
    %v117 = vunpack.c.h.b16 %v68
    %v118 = vunpack.c.l.b16 %v69
    %v119 = vunpack.c.h.b16 %v69
    %v120 = vunpack.c.l.b16 %v70
    %v121 = vunpack.c.h.b16 %v70
    %v122 = vunpack.c.l.b16 %v71
    %v123 = vunpack.c.h.b16 %v71
    %v124 = vunpack.c.l.b16 %v72
    %v125 = vunpack.c.h.b16 %v72
    %v126 = vunpack.c.l.b16 %v73
    %v127 = vunpack.c.h.b16 %v73
    %v128 = vunpack.c.l.b16 %v74
    %v129 = vunpack.c.h.b16 %v74
    %v130 = vunpack.c.l.b16 %v75
    %v131 = vunpack.c.h.b16 %v75
    %v132 = vunpack.c.l.b16 %v76
    %v133 = vunpack.c.h.b16 %v76
    %v134 = vunpack.c.l.b16 %v77
    %v135 = vunpack.c.h.b16 %v77
    %v136 = vunpack.c.l.b16 %v78
    %v137 = vunpack.c.h.b16 %v78
    %v138 = vunpack.c.l.b16 %v79
    %v139 = vunpack.c.h.b16 %v79
    %v140 = vpack.c.b16 %v110, %v108
    %v141 = vpack.c.b16 %v111, %v109
    %v142 = vpack.c.b16 %v114, %v112
    %v143 = vpack.c.b16 %v115, %v113
    %v144 = vpack.c.b16 %v118, %v116
    %v145 = vpack.c.b16 %v119, %v117
    %v146 = vpack.c.b16 %v122, %v120
    %v147 = vpack.c.b16 %v123, %v121
    %v148 = vpack.c.b16 %v126, %v124
    %v149 = vpack.c.b16 %v127, %v125
    %v150 = vpack.c.b16 %v130, %v128
    %v151 = vpack.c.b16 %v131, %v129
    %v152 = vpack.c.b16 %v134, %v132
    %v153 = vpack.c.b16 %v135, %v133
    %v154 = vpack.c.b16 %v138, %v136
    %v155 = vpack.c.b16 %v139, %v137
    %172 = vmatprep.subr.bf16.mxu0 %v141
    %173 = vmatpush1.bf16.msra.mxu0 %v140
    %174 = vmatprep.subr.bf16.mxu0 %v143
    %175 = vmatpush1.bf16.msra.mxu0 %v142
    %176 = vmatprep.subr.bf16.mxu0 %v145
    %177 = vmatpush1.bf16.msra.mxu0 %v144
    %178 = vmatprep.subr.bf16.mxu0 %v147
    %179 = vmatpush1.bf16.msra.mxu0 %v146
    %180 = vmatprep.subr.bf16.mxu0 %v149
    %181 = vmatpush1.bf16.msra.mxu0 %v148
    %182 = vmatprep.subr.bf16.mxu0 %v151
    %183 = vmatpush1.bf16.msra.mxu0 %v150
    %184 = vmatprep.subr.bf16.mxu0 %v153
    %185 = vmatpush1.bf16.msra.mxu0 %v152
    %186 = vmatprep.subr.bf16.mxu0 %v155
    %187 = vmatpush1.bf16.msra.mxu0 %v154
    %188 = vmatprep.subr.bf16.mxu0 0
    %189 = vmatpush1.bf16.msra.mxu0 0
    %190 = vmatprep.subr.bf16.mxu0 0
    %191 = vmatpush1.bf16.msra.mxu0 0
    %192 = vmatprep.subr.bf16.mxu0 0
    %193 = vmatpush1.bf16.msra.mxu0 0
    %194 = vmatprep.subr.bf16.mxu0 0
    %195 = vmatpush1.bf16.msra.mxu0 0
    %196 = vmatprep.subr.bf16.mxu0 0
    %197 = vmatpush1.bf16.msra.mxu0 0
    %198 = vmatprep.subr.bf16.mxu0 0
    %199 = vmatpush1.bf16.msra.mxu0 0
    %200 = vmatprep.subr.bf16.mxu0 0
    %201 = vmatpush1.bf16.msra.mxu0 0
    %202 = vmatprep.subr.bf16.mxu0 0
    %203 = vmatpush1.bf16.msra.mxu0 0
    %204 = vmatprep.mubr.bf16.mxu0 0
    %205 = vmatmul.mubr.bf16.gmra.mrb[0].mxu0 %v63
    %v206 = vpop.f32.mrb[0].mxu0
    %v207 = vadd.f32 %v85, %v206
    %v208 = vpop.f32.mrb[0].mxu0
    %v209 = vadd.f32 %v89, %v208
    %v210 = vpop.f32.mrb[0].mxu0
    %v211 = vpop.f32.mrb[0].mxu0
    %212 = vdwg.mxu0
    %v213 = vpack.c.bf16 %v207, %v207
    %v214 = vpack.c.bf16 %v209, %v209
    %v215 = vxor.u32 %v213, 2147516416
    %v216 = vxor.u32 %v214, 2147516416
    %v218 = vmul.bf16 %v215, 1069105081
    %v219 = vpow.bf16.pop %v218
    %v221 = vmul.bf16 %v216, 1069105081
    %v222 = vpow.bf16.pop %v221
    %v223 = vadd.bf16 %v219, 1065369472
    %v224 = vadd.bf16 %v222, 1065369472
    %v225 = vrcp.bf16.pop %v223
    %v226 = vmul.bf16 1065369472, %v225
    %v227 = vrcp.bf16.pop %v224
    %v228 = vmul.bf16 1065369472, %v227
    %v229 = vmul.bf16 %v213, %v226
    %v230 = vmul.bf16 %v214, %v228
    %v231 = vld [vmem:[#allocation7] sm:$0xf]
    %v232 = vld [vmem:[#allocation7 + $0x4] sm:$0xf]
    %v233 = vld [vmem:[#allocation7 + $0x8] sm:$0xf]
    %v234 = vld [vmem:[#allocation7 + $0xc] sm:$0xf]
    %v235 = vld [vmem:[#allocation7 + $0x10] sm:$0xf]
    %v236 = vld [vmem:[#allocation7 + $0x14] sm:$0xf]
    %v237 = vld [vmem:[#allocation7 + $0x18] sm:$0xf]
    %v238 = vld [vmem:[#allocation7 + $0x1c] sm:$0xf]
    %v239 = vld [vmem:[#allocation7 + $0x20] sm:$0xf]
    %v240 = vld [vmem:[#allocation7 + $0x24] sm:$0xf]
    %v241 = vld [vmem:[#allocation7 + $0x28] sm:$0xf]
    %v242 = vld [vmem:[#allocation7 + $0x2c] sm:$0xf]
    %v243 = vld [vmem:[#allocation7 + $0x30] sm:$0xf]
    %v244 = vld [vmem:[#allocation7 + $0x34] sm:$0xf]
    %v245 = vld [vmem:[#allocation7 + $0x38] sm:$0xf]
    %v246 = vld [vmem:[#allocation7 + $0x3c] sm:$0xf]
    %v247 = vld [vmem:[#allocation7 + $0x40] sm:$0xf]
    %v248 = vld [vmem:[#allocation7 + $0x44] sm:$0xf]
    %v249 = vld [vmem:[#allocation7 + $0x48] sm:$0xf]
    %v250 = vld [vmem:[#allocation7 + $0x4c] sm:$0xf]
    %v251 = vld [vmem:[#allocation7 + $0x50] sm:$0xf]
    %v252 = vld [vmem:[#allocation7 + $0x54] sm:$0xf]
    %v253 = vld [vmem:[#allocation7 + $0x58] sm:$0xf]
    %v254 = vld [vmem:[#allocation7 + $0x5c] sm:$0xf]
    %v255 = vld [vmem:[#allocation7 + $0x60] sm:$0xf]
    %v256 = vld [vmem:[#allocation7 + $0x64] sm:$0xf]
    %v257 = vld [vmem:[#allocation7 + $0x68] sm:$0xf]
    %v258 = vld [vmem:[#allocation7 + $0x6c] sm:$0xf]
    %v259 = vld [vmem:[#allocation7 + $0x70] sm:$0xf]
    %v260 = vld [vmem:[#allocation7 + $0x74] sm:$0xf]
    %v261 = vld [vmem:[#allocation7 + $0x78] sm:$0xf]
    %v262 = vld [vmem:[#allocation7 + $0x7c] sm:$0xf]
    %v263 = vld [vmem:[%s4] sm:$0x1]
    %v265 = vlaneseq
    %v266 = vshrl.u32 %v265, 7
    %v267 = vsub.s32 0, %v266
    %v268 = vrot.slane %v263, %v267
    %v302 = vunpack.c.l.b16 %v231
    %v303 = vunpack.c.l.b16 %v232
    %v304 = vunpack.c.l.b16 %v233
    %v305 = vunpack.c.l.b16 %v234
    %v306 = vunpack.c.l.b16 %v235
    %v307 = vunpack.c.l.b16 %v236
    %v308 = vunpack.c.l.b16 %v237
    %v309 = vunpack.c.l.b16 %v238
    %v310 = vunpack.c.l.b16 %v239
    %v311 = vunpack.c.l.b16 %v240
    %v312 = vunpack.c.l.b16 %v241
    %v313 = vunpack.c.l.b16 %v242
    %v314 = vunpack.c.l.b16 %v243
    %v315 = vunpack.c.l.b16 %v244
    %v316 = vunpack.c.l.b16 %v245
    %v317 = vunpack.c.l.b16 %v246
    %v318 = vunpack.c.l.b16 %v247
    %v319 = vunpack.c.l.b16 %v248
    %v320 = vunpack.c.l.b16 %v249
    %v321 = vunpack.c.l.b16 %v250
    %v322 = vunpack.c.l.b16 %v251
    %v323 = vunpack.c.l.b16 %v252
    %v324 = vunpack.c.l.b16 %v253
    %v325 = vunpack.c.l.b16 %v254
    %v326 = vunpack.c.l.b16 %v255
    %v327 = vunpack.c.l.b16 %v256
    %v328 = vunpack.c.l.b16 %v257
    %v329 = vunpack.c.l.b16 %v258
    %v330 = vunpack.c.l.b16 %v259
    %v331 = vunpack.c.l.b16 %v260
    %v332 = vunpack.c.l.b16 %v261
    %v333 = vunpack.c.l.b16 %v262
    %v334 = vpack.c.b16 %v303, %v302
    %v335 = vpack.c.b16 %v305, %v304
    %v336 = vpack.c.b16 %v307, %v306
    %v337 = vpack.c.b16 %v309, %v308
    %v338 = vpack.c.b16 %v311, %v310
    %v339 = vpack.c.b16 %v313, %v312
    %v340 = vpack.c.b16 %v315, %v314
    %v341 = vpack.c.b16 %v317, %v316
    %v342 = vpack.c.b16 %v319, %v318
    %v343 = vpack.c.b16 %v321, %v320
    %v344 = vpack.c.b16 %v323, %v322
    %v345 = vpack.c.b16 %v325, %v324
    %v346 = vpack.c.b16 %v327, %v326
    %v347 = vpack.c.b16 %v329, %v328
    %v348 = vpack.c.b16 %v331, %v330
    %v349 = vpack.c.b16 %v333, %v332
    %366 = vmatprep.subr.bf16.mxu0 0
    %367 = vmatpush1.bf16.msra.mxu0 %v334
    %368 = vmatprep.subr.bf16.mxu0 0
    %369 = vmatpush1.bf16.msra.mxu0 %v335
    %370 = vmatprep.subr.bf16.mxu0 0
    %371 = vmatpush1.bf16.msra.mxu0 %v336
    %372 = vmatprep.subr.bf16.mxu0 0
    %373 = vmatpush1.bf16.msra.mxu0 %v337
    %374 = vmatprep.subr.bf16.mxu0 0
    %375 = vmatpush1.bf16.msra.mxu0 %v338
    %376 = vmatprep.subr.bf16.mxu0 0
    %377 = vmatpush1.bf16.msra.mxu0 %v339
    %378 = vmatprep.subr.bf16.mxu0 0
    %379 = vmatpush1.bf16.msra.mxu0 %v340
    %380 = vmatprep.subr.bf16.mxu0 0
    %381 = vmatpush1.bf16.msra.mxu0 %v341
    %382 = vmatprep.subr.bf16.mxu0 0
    %383 = vmatpush1.bf16.msra.mxu0 %v342
    %384 = vmatprep.subr.bf16.mxu0 0
    %385 = vmatpush1.bf16.msra.mxu0 %v343
    %386 = vmatprep.subr.bf16.mxu0 0
    %387 = vmatpush1.bf16.msra.mxu0 %v344
    %388 = vmatprep.subr.bf16.mxu0 0
    %389 = vmatpush1.bf16.msra.mxu0 %v345
    %390 = vmatprep.subr.bf16.mxu0 0
    %391 = vmatpush1.bf16.msra.mxu0 %v346
    %392 = vmatprep.subr.bf16.mxu0 0
    %393 = vmatpush1.bf16.msra.mxu0 %v347
    %394 = vmatprep.subr.bf16.mxu0 0
    %395 = vmatpush1.bf16.msra.mxu0 %v348
    %396 = vmatprep.subr.bf16.mxu0 0
    %397 = vmatpush1.bf16.msra.mxu0 %v349
    %398 = vmatprep.mubr.bf16.mxu0 %v230
    %399 = vmatmul.mubr.bf16.gmra.mrb[0].mxu0 %v229
    %v400 = vpop.f32.mrb[0].mxu0
    %v401 = vadd.f32 %v268, %v400
    %v402 = vpop.f32.mrb[0].mxu0
    %v403 = vpop.f32.mrb[0].mxu0
    %v404 = vpop.f32.mrb[0].mxu0
    %405 = vdwg.mxu0
    %406 = vst [vmem:[#allocation8] sm:$0xf] %v401
    // Predicated region
    $region34: #{tpu_custom_call.1} parent=1 // pred_check
      _
    $region35: #{tpu_custom_call.1} parent=1 // pred_check_branch
      %408 = sbr.rel (0) target = $region37
    $region36: #{tpu_custom_call.1} parent=1 // pred_region
      %s410 = ssub.s32 64, 64
      %411 = vsyncadd [#allocation4], %s410
      %s413 = sshll.u32 [#allocation8], 4
      %s414 = int_to_ptr.vmem [resolvable:$true] %s413
      %416 = dma.vmem_to_hbm [thread:$0]  %s414, 64, %s5, [#allocation4]
    $region37: #{tpu_custom_call.1} parent=1 // pred_fallthru
      _
    // Predicated region
    $region38: #{tpu_custom_call.1} parent=1 // pred_check
      _
    $region39: #{tpu_custom_call.1} parent=1 // pred_check_branch
      %418 = sbr.rel (0) target = $region41
    $region40: #{tpu_custom_call.1} parent=1 // pred_region
      %419 = dma.done [#allocation4], 64
    $region41: #{tpu_custom_call.1} parent=1 // pred_fallthru
      _
    %420 = vsyncpa [#allocation3], 1
    %421 = vsyncpa [#allocation6], 1
    %422 = vsyncpa [#allocation4], 1

</llo_original>
